<compile_context>
chip_gen: v6e
topology: v6e:2x2x1
jax: 0.10.0
libtpu: 0.0.40
codegen_flags: <defaults>
</compile_context>

<pallas_src>
import functools

import jax
import jax.numpy as jnp
from jax.experimental import pallas as pl
from jax.experimental.pallas import tpu as pltpu

# ---- module hyper-parameters (DGFMBLayer defaults) -------------------------
NUM_CHANNELS = 64
DEG_FULL = 256
DEG_RED = 64
COMBINED = NUM_CHANNELS + DEG_RED                     # 128
# num_layers = 2 (int branch), combined > 15:
HIDDEN1 = (NUM_CHANNELS - COMBINED) // 2 + COMBINED   # 96
HIDDEN2 = (NUM_CHANNELS - COMBINED) // 1 + COMBINED   # 64 (== NUM_CHANNELS)
assert HIDDEN2 == NUM_CHANNELS, "kernel assumes the last attention layer outputs num_channels"

_MAX_BLOCK_BYTES = 8 * 1024 * 1024   # cap for one streamed feature block (fallback path)


@functools.lru_cache(maxsize=1)
def _vmem_budget_bytes():
    """Generation-aware VMEM budget with compiler headroom.
    ~48 MiB on v7x (64 MiB physical), ~96 MiB on v5e/v6e (128 MiB physical)."""
    cap = 64 * 1024 * 1024  # conservative default if the query fails
    try:
        cap = int(getattr(pltpu.get_tpu_info(), "vmem_capacity_bytes", cap))
    except Exception:
        pass
    return max(32 * 1024 * 1024, (cap * 3) // 4)


def _choose_tile(hw, max_lanes):
    """Return (tile, padded_hw): a lane-dense (multiple of 128) spatial tile.
    Prefer an exact divisor of hw; otherwise pad hw up to a tile multiple."""
    max_lanes = max(128, (max_lanes // 128) * 128)
    if hw % 128 == 0 and hw <= max_lanes:
        return hw, hw
    best = None
    for t in range(128, min(hw, max_lanes) + 1, 128):
        if hw % t == 0:
            best = t
    if best is not None:
        return best, hw
    hw_128 = ((hw + 127) // 128) * 128
    if hw_128 <= max_lanes:
        return hw_128, hw_128
    t = max_lanes
    return t, ((hw + t - 1) // t) * t


# --------------------------------------------------------------------------
# Fused kernel (slab-resident): GAP -> attention MLP -> sigmoid+1 -> modulate.
# One HBM read + one HBM write of `features`.
#   feat_ref : (1, C, HW)   native-layout per-batch slab
#   enc_ref  : (1, DEG_FULL, 1)
#   weights  : column ("W @ x") form; w1 pre-split -> no in-kernel concat
# --------------------------------------------------------------------------
def fused_kernel(feat_ref, enc_ref, wred_ref, bred_ref,
                 w1f_ref, w1e_ref, b1_ref, w2_ref, b2_ref,
                 out_ref, *, inv_hw):
    feat = feat_ref[0]                                                   # (C, HW)
    gap = jnp.sum(feat, axis=-1, keepdims=True, dtype=jnp.float32) * inv_hw   # (C, 1)
    enc = enc_ref[0].astype(jnp.float32)                                 # (DEG_FULL, 1)
    red = jnp.dot(wred_ref[...], enc,
                  preferred_element_type=jnp.float32) + bred_ref[...]    # (DEG_RED, 1)
    # concat([gap, red]) @ w1  ==  w1_feat^T @ gap + w1_enc^T @ red
    h1 = (jnp.dot(w1f_ref[...], gap, preferred_element_type=jnp.float32)
          + jnp.dot(w1e_ref[...], red, preferred_element_type=jnp.float32)
          + b1_ref[...])                                                 # (HIDDEN1, 1)
    h2 = jnp.dot(w2_ref[...], h1,
                 preferred_element_type=jnp.float32) + b2_ref[...]       # (C, 1)
    scale = jax.nn.sigmoid(h2) + 1.0                                     # f32, fused "+features"
    out_ref[0] = (feat * scale).astype(out_ref.dtype)


# --------------------------------------------------------------------------
# Fallback kernel A: spatially-tiled GAP sum (f32), accumulated in the resident
# output block.  NOTE: the s axis carries the accumulation -> it MUST stay the
# innermost grid axis and be marked "arbitrary".
# --------------------------------------------------------------------------
def gap_kernel(feat_ref, gapsum_ref):
    @pl.when(pl.program_id(1) == 0)
    def _():
        gapsum_ref[0] = jnp.zeros((NUM_CHANNELS, 1), jnp.float32)

    gapsum_ref[0] += jnp.sum(feat_ref[0], axis=-1, keepdims=True, dtype=jnp.float32)


# --------------------------------------------------------------------------
# Fallback kernel B: out = feat * scale   (lane-broadcast of per-channel scale)
# --------------------------------------------------------------------------
def modulate_kernel(feat_ref, scale_ref, out_ref):
    out_ref[0] = (feat_ref[0] * scale_ref[0]).astype(out_ref.dtype)


def _fused_call(feat, enc, params, inv_hw, budget):
    wred, bred, w1, b1, w2, b2 = params
    N, C, HW = feat.shape
    # Tiny weight re-layouts to column form; negligible XLA ops.
    wred_t = wred.T                                  # (DEG_RED, DEG_FULL)
    bred_c = bred.reshape(DEG_RED, 1)
    w1f_t = w1[:NUM_CHANNELS].T                      # (HIDDEN1, C)  -- GAP half of the concat
    w1e_t = w1[NUM_CHANNELS:].T                      # (HIDDEN1, DEG_RED)
    b1_c = b1.reshape(HIDDEN1, 1)
    w2_t = w2.T                                      # (C, HIDDEN1)
    b2_c = b2.reshape(HIDDEN2, 1)

    return pl.pallas_call(
        functools.partial(fused_kernel, inv_hw=inv_hw),
        out_shape=jax.ShapeDtypeStruct((N, C, HW), feat.dtype),
        grid_spec=pltpu.PrefetchScalarGridSpec(
            num_scalar_prefetch=0,
            grid=(N,),
            in_specs=[
                pl.BlockSpec((1, C, HW), lambda n: (n, 0, 0)),
                pl.BlockSpec((1, DEG_FULL, 1), lambda n: (n, 0, 0)),
                pl.BlockSpec((DEG_RED, DEG_FULL), lambda n: (0, 0)),
                pl.BlockSpec((DEG_RED, 1), lambda n: (0, 0)),
                pl.BlockSpec((HIDDEN1, NUM_CHANNELS), lambda n: (0, 0)),
                pl.BlockSpec((HIDDEN1, DEG_RED), lambda n: (0, 0)),
                pl.BlockSpec((HIDDEN1, 1), lambda n: (0, 0)),
                pl.BlockSpec((NUM_CHANNELS, HIDDEN1), lambda n: (0, 0)),
                pl.BlockSpec((HIDDEN2, 1), lambda n: (0, 0)),
            ],
            out_specs=pl.BlockSpec((1, C, HW), lambda n: (n, 0, 0)),
        ),
        compiler_params=pltpu.CompilerParams(
            dimension_semantics=("parallel",),
            vmem_limit_bytes=budget),
    )(feat, enc, wred_t, bred_c, w1f_t, w1e_t, b1_c, w2_t, b2_c)


def _unfused_call(feat, enc, params, inv_hw, budget, itemsize, max_tile_lanes):
    wred, bred, w1, b1, w2, b2 = params
    N, C, HW = feat.shape

    if max_tile_lanes is None:
        # kernel B double-buffers input + output tiles -> ~4 blocks of C*T*itemsize
        max_tile_lanes = min(_MAX_BLOCK_BYTES, budget // 4) // (C * itemsize)
    T, HW_p = _choose_tile(HW, max_tile_lanes)
    if HW_p != HW:
        # Zero padding is GAP-safe (inv_hw uses the true HW) and modulate writes
        # zeros in the padded tail, which is sliced off below.
        feat_k = jnp.pad(feat, ((0, 0), (0, 0), (0, HW_p - HW)))
    else:
        feat_k = feat
    S = HW_p // T

    # ---- kernel A: tiled GAP sum (reduction over innermost "arbitrary" axis) --
    gap_sum = pl.pallas_call(
        gap_kernel,
        out_shape=jax.ShapeDtypeStruct((N, C, 1), jnp.float32),
        grid_spec=pltpu.PrefetchScalarGridSpec(
            num_scalar_prefetch=0,
            grid=(N, S),
            in_specs=[pl.BlockSpec((1, C, T), lambda n, s: (n, 0, s))],
            out_specs=pl.BlockSpec((1, C, 1), lambda n, s: (n, 0, 0)),
        ),
        compiler_params=pltpu.CompilerParams(
            dimension_semantics=("parallel", "arbitrary"),
            vmem_limit_bytes=budget),
    )(feat_k)

    # ---- tiny attention MLP in plain XLA (off the critical path), all f32 ----
    gap = gap_sum[..., 0] * inv_hw                        # (N, C)
    enc2d = enc[..., 0].astype(jnp.float32)               # (N, DEG_FULL)
    red = enc2d @ wred + bred                             # (N, DEG_RED)
    h1 = gap @ w1[:NUM_CHANNELS] + red @ w1[NUM_CHANNELS:] + b1
    h2 = h1 @ w2 + b2
    scale = (jax.nn.sigmoid(h2) + 1.0)[..., None]         # (N, C, 1) float32

    # ---- kernel B: out = feat * (att + 1), lane-dense, fully parallel --------
    out = pl.pallas_call(
        modulate_kernel,
        out_shape=jax.ShapeDtypeStruct((N, C, HW_p), feat.dtype),
        grid_spec=pltpu.PrefetchScalarGridSpec(
            num_scalar_prefetch=0,
            grid=(N, S),
            in_specs=[
                pl.BlockSpec((1, C, T), lambda n, s: (n, 0, s)),
                pl.BlockSpec((1, C, 1), lambda n, s: (n, 0, 0)),
            ],
            out_specs=pl.BlockSpec((1, C, T), lambda n, s: (n, 0, s)),
        ),
        compiler_params=pltpu.CompilerParams(
            dimension_semantics=("parallel", "parallel"),
            vmem_limit_bytes=budget),
    )(feat_k, scale)

    if HW_p != HW:
        out = out[:, :, :HW]
    return out


@functools.partial(jax.jit, static_argnames=("force_unfused", "max_tile_lanes"))
def dgfmb_forward(features_nchw, encoding_nchw, params,
                  force_unfused=False, max_tile_lanes=None):
    """features_nchw: (N, C, H, W); encoding_nchw: (N, DEG_FULL, 1, 1)."""
    N, C, H, W = features_nchw.shape
    assert C == NUM_CHANNELS
    HW = H * W
    inv_hw = 1.0 / HW
    itemsize = jnp.dtype(features_nchw.dtype).itemsize
    budget = _vmem_budget_bytes()

    feat = features_nchw.reshape(N, C, HW)        # free row-major view, no transpose
    enc = encoding_nchw.reshape(N, DEG_FULL, 1)

    # Fused path needs (double-buffered in + out) slab + small operands in VMEM.
    fused_ok = (4 * C * HW * itemsize + 2 * 1024 * 1024) <= budget

    if fused_ok and not force_unfused:
        out = _fused_call(feat, enc, params, inv_hw, budget)
    else:
        out = _unfused_call(feat, enc, params, inv_hw, budget, itemsize, max_tile_lanes)
    return out.reshape(N, C, H, W)


def init_params(key):
    """Deterministic synthetic weights.  1x1 conv weight (out,in,1,1) is stored
    as an (in, out) matrix so the reference does y = x @ W + b."""
    ks = jax.random.split(key, 6)
    scale = 0.05
    wred = scale * jax.random.normal(ks[0], (DEG_FULL, DEG_RED), jnp.float32)
    bred = scale * jax.random.normal(ks[1], (1, DEG_RED), jnp.float32)
    w1 = scale * jax.random.normal(ks[2], (COMBINED, HIDDEN1), jnp.float32)
    b1 = scale * jax.random.normal(ks[3], (1, HIDDEN1), jnp.float32)
    w2 = scale * jax.random.normal(ks[4], (HIDDEN1, HIDDEN2), jnp.float32)
    b2 = scale * jax.random.normal(ks[5], (1, HIDDEN2), jnp.float32)
    return (wred, bred, w1, b1, w2, b2)


def reference_forward(features, encoding, params):
    """Pure-JAX reference mirroring the PyTorch forward."""
    wred, bred, w1, b1, w2, b2 = params
    gap = jnp.mean(features, axis=(2, 3))                       # (N, C)
    enc = encoding.reshape(encoding.shape[0], -1)               # (N, DEG_FULL)
    red = enc @ wred + bred
    cat = jnp.concatenate([gap, red], axis=-1)
    att = jax.nn.sigmoid((cat @ w1 + b1) @ w2 + b2)             # (N, C)
    att = att[:, :, None, None]
    return features * att + features


if __name__ == "__main__":
    key = jax.random.PRNGKey(0)
    k_feat, k_enc, k_param = jax.random.split(key, 3)
    params = init_params(k_param)

    # 1) fused single-kernel path (per-batch slab fits VMEM)
    N, H, W = 2, 16, 16
    features = jax.random.normal(k_feat, (N, NUM_CHANNELS, H, W), jnp.float32)
    encoding = jax.random.normal(k_enc, (N, DEG_FULL, 1, 1), jnp.float32)
    out = jax.block_until_ready(dgfmb_forward(features, encoding, params))
    ref = reference_forward(features, encoding, params)
    assert out.shape == (N, NUM_CHANNELS, H, W)
    assert jnp.allclose(out, ref, atol=1e-4, rtol=1e-4), "fused path mismatch"

    # 2) streaming (two-kernel) fallback path with lane-dense spatial tiles
    out2 = jax.block_until_ready(
        dgfmb_forward(features, encoding, params,
                      force_unfused=True, max_tile_lanes=128))
    assert jnp.allclose(out2, ref, atol=1e-4, rtol=1e-4), "streaming path mismatch"

    # 3) streaming path where H*W is not a multiple of 128 (zero-padded spatial axis)
    features3 = jax.random.normal(k_feat, (1, NUM_CHANNELS, 15, 15), jnp.float32)
    encoding3 = jax.random.normal(k_enc, (1, DEG_FULL, 1, 1), jnp.float32)
    out3 = jax.block_until_ready(
        dgfmb_forward(features3, encoding3, params,
                      force_unfused=True, max_tile_lanes=128))
    ref3 = reference_forward(features3, encoding3, params)
    assert jnp.allclose(out3, ref3, atol=1e-4, rtol=1e-4), "padded path mismatch"

    print("KERNEL_OK")
</pallas_src>

<mosaic_0001>
module attributes {stable_mosaic.version = 11 : i64} {
  func.func @fused_kernel(%arg0: i32, %arg1: memref<1x64x256xf32, #tpu.memory_space<vmem>>, %arg2: memref<1x256x1xf32, #tpu.memory_space<vmem>>, %arg3: memref<64x256xf32, #tpu.memory_space<vmem>>, %arg4: memref<64x1xf32, #tpu.memory_space<vmem>>, %arg5: memref<96x64xf32, #tpu.memory_space<vmem>>, %arg6: memref<96x64xf32, #tpu.memory_space<vmem>>, %arg7: memref<96x1xf32, #tpu.memory_space<vmem>>, %arg8: memref<64x96xf32, #tpu.memory_space<vmem>>, %arg9: memref<64x1xf32, #tpu.memory_space<vmem>>, %arg10: memref<1x64x256xf32, #tpu.memory_space<vmem>>) attributes {dimension_semantics = [#tpu.dimension_semantics<parallel>], iteration_bounds = array<i64: 2>, scalar_prefetch = 0 : i64, scratch_operands = 0 : i64, tpu.core_type = #tpu.core_type<tc>, window_params = [{transform_indices = @transform_0, window_bounds = array<i64: 1, 64, 256>}, {transform_indices = @transform_1, window_bounds = array<i64: 1, 256, 1>}, {pipeline_mode = #tpu.pipeline_mode<synchronous>, transform_indices = @transform_2, window_bounds = array<i64: 64, 256>}, {pipeline_mode = #tpu.pipeline_mode<synchronous>, transform_indices = @transform_3, window_bounds = array<i64: 64, 1>}, {pipeline_mode = #tpu.pipeline_mode<synchronous>, transform_indices = @transform_4, window_bounds = array<i64: 96, 64>}, {pipeline_mode = #tpu.pipeline_mode<synchronous>, transform_indices = @transform_5, window_bounds = array<i64: 96, 64>}, {pipeline_mode = #tpu.pipeline_mode<synchronous>, transform_indices = @transform_6, window_bounds = array<i64: 96, 1>}, {pipeline_mode = #tpu.pipeline_mode<synchronous>, transform_indices = @transform_7, window_bounds = array<i64: 64, 96>}, {pipeline_mode = #tpu.pipeline_mode<synchronous>, transform_indices = @transform_8, window_bounds = array<i64: 64, 1>}, {transform_indices = @transform_9, window_bounds = array<i64: 1, 64, 256>}]} {
    %c0 = arith.constant 0 : index
    %c0_0 = arith.constant 0 : index
    %c0_1 = arith.constant 0 : index
    %0 = vector.load %arg1[%c0, %c0_0, %c0_1] : memref<1x64x256xf32, #tpu.memory_space<vmem>>, vector<1x64x256xf32>
    %1 = vector.shape_cast %0 : vector<1x64x256xf32> to vector<64x256xf32>
    %cst = arith.constant dense<0.000000e+00> : vector<64xf32>
    %2 = vector.multi_reduction <add>, %1, %cst [1] : vector<64x256xf32> to vector<64xf32>
    %3 = vector.shape_cast %2 : vector<64xf32> to vector<64x1xf32>
    %cst_2 = arith.constant 3.906250e-03 : f32
    %4 = vector.broadcast %cst_2 : f32 to vector<64x1xf32>
    %5 = arith.mulf %3, %4 : vector<64x1xf32>
    %c0_3 = arith.constant 0 : index
    %c0_4 = arith.constant 0 : index
    %c0_5 = arith.constant 0 : index
    %6 = vector.load %arg2[%c0_3, %c0_4, %c0_5] : memref<1x256x1xf32, #tpu.memory_space<vmem>>, vector<1x256x1xf32>
    %7 = vector.shape_cast %6 : vector<1x256x1xf32> to vector<256x1xf32>
    %c0_6 = arith.constant 0 : index
    %c0_7 = arith.constant 0 : index
    %8 = vector.load %arg3[%c0_6, %c0_7] : memref<64x256xf32, #tpu.memory_space<vmem>>, vector<64x256xf32>
    %cst_8 = arith.constant dense<0.000000e+00> : vector<64x1xf32>
    %9 = tpu.matmul %8, %7, %cst_8 {dimension_numbers = #tpu.dot_dimension_numbers<[1], [0], [0], [1], [0, 0, 1, 1], [], []>} : vector<64x256xf32>, vector<256x1xf32>, vector<64x1xf32> -> vector<64x1xf32>
    %c0_9 = arith.constant 0 : index
    %c0_10 = arith.constant 0 : index
    %10 = vector.load %arg4[%c0_9, %c0_10] : memref<64x1xf32, #tpu.memory_space<vmem>>, vector<64x1xf32>
    %11 = arith.addf %9, %10 : vector<64x1xf32>
    %c0_11 = arith.constant 0 : index
    %c0_12 = arith.constant 0 : index
    %12 = vector.load %arg5[%c0_11, %c0_12] : memref<96x64xf32, #tpu.memory_space<vmem>>, vector<96x64xf32>
    %cst_13 = arith.constant dense<0.000000e+00> : vector<96x1xf32>
    %13 = tpu.matmul %12, %5, %cst_13 {dimension_numbers = #tpu.dot_dimension_numbers<[1], [0], [0], [1], [0, 0, 1, 1], [], []>} : vector<96x64xf32>, vector<64x1xf32>, vector<96x1xf32> -> vector<96x1xf32>
    %c0_14 = arith.constant 0 : index
    %c0_15 = arith.constant 0 : index
    %14 = vector.load %arg6[%c0_14, %c0_15] : memref<96x64xf32, #tpu.memory_space<vmem>>, vector<96x64xf32>
    %cst_16 = arith.constant dense<0.000000e+00> : vector<96x1xf32>
    %15 = tpu.matmul %14, %11, %cst_16 {dimension_numbers = #tpu.dot_dimension_numbers<[1], [0], [0], [1], [0, 0, 1, 1], [], []>} : vector<96x64xf32>, vector<64x1xf32>, vector<96x1xf32> -> vector<96x1xf32>
    %16 = arith.addf %13, %15 : vector<96x1xf32>
    %c0_17 = arith.constant 0 : index
    %c0_18 = arith.constant 0 : index
    %17 = vector.load %arg7[%c0_17, %c0_18] : memref<96x1xf32, #tpu.memory_space<vmem>>, vector<96x1xf32>
    %18 = arith.addf %16, %17 : vector<96x1xf32>
    %c0_19 = arith.constant 0 : index
    %c0_20 = arith.constant 0 : index
    %19 = vector.load %arg8[%c0_19, %c0_20] : memref<64x96xf32, #tpu.memory_space<vmem>>, vector<64x96xf32>
    %cst_21 = arith.constant dense<0.000000e+00> : vector<64x1xf32>
    %20 = tpu.matmul %19, %18, %cst_21 {dimension_numbers = #tpu.dot_dimension_numbers<[1], [0], [0], [1], [0, 0, 1, 1], [], []>} : vector<64x96xf32>, vector<96x1xf32>, vector<64x1xf32> -> vector<64x1xf32>
    %c0_22 = arith.constant 0 : index
    %c0_23 = arith.constant 0 : index
    %21 = vector.load %arg9[%c0_22, %c0_23] : memref<64x1xf32, #tpu.memory_space<vmem>>, vector<64x1xf32>
    %22 = arith.addf %20, %21 : vector<64x1xf32>
    %23 = arith.negf %22 : vector<64x1xf32>
    %24 = math.exp %23 : vector<64x1xf32>
    %cst_24 = arith.constant 1.000000e+00 : f32
    %25 = vector.broadcast %cst_24 : f32 to vector<64x1xf32>
    %26 = arith.addf %25, %24 : vector<64x1xf32>
    %27 = arith.divf %25, %26 : vector<64x1xf32>
    %cst_25 = arith.constant 1.000000e+00 : f32
    %28 = vector.broadcast %cst_25 : f32 to vector<64x1xf32>
    %29 = arith.addf %27, %28 : vector<64x1xf32>
    %30 = vector.broadcast %29 : vector<64x1xf32> to vector<64x256xf32>
    %31 = arith.mulf %1, %30 : vector<64x256xf32>
    %c0_26 = arith.constant 0 : index
    %c0_27 = arith.constant 0 : index
    %c0_28 = arith.constant 0 : index
    %32 = vector.load %arg10[%c0_26, %c0_27, %c0_28] : memref<1x64x256xf32, #tpu.memory_space<vmem>>, vector<1x64x256xf32>
    %33 = vector.shape_cast %32 : vector<1x64x256xf32> to vector<64x256xf32>
    %34 = vector.shape_cast %31 : vector<64x256xf32> to vector<1x64x256xf32>
    tpu.vector_store %arg10[%c0_26, %c0_27, %c0_28], %34 {strides = array<i32>} : memref<1x64x256xf32, #tpu.memory_space<vmem>>, vector<1x64x256xf32>,
    return
  }
  func.func @transform_0(%arg0: i32) -> (i32, i32, i32) {
    %c0_i32 = arith.constant 0 : i32
    %c0_i32_0 = arith.constant 0 : i32
    %c0_i32_1 = arith.constant 0 : i32
    return %arg0, %c0_i32, %c0_i32_0 : i32, i32, i32
  }
  func.func @transform_1(%arg0: i32) -> (i32, i32, i32) {
    %c0_i32 = arith.constant 0 : i32
    %c0_i32_0 = arith.constant 0 : i32
    %c0_i32_1 = arith.constant 0 : i32
    return %arg0, %c0_i32, %c0_i32_0 : i32, i32, i32
  }
  func.func @transform_2(%arg0: i32) -> (i32, i32) {
    %c0_i32 = arith.constant 0 : i32
    %c0_i32_0 = arith.constant 0 : i32
    %c0_i32_1 = arith.constant 0 : i32
    return %c0_i32, %c0_i32_0 : i32, i32
  }
  func.func @transform_3(%arg0: i32) -> (i32, i32) {
    %c0_i32 = arith.constant 0 : i32
    %c0_i32_0 = arith.constant 0 : i32
    %c0_i32_1 = arith.constant 0 : i32
    return %c0_i32, %c0_i32_0 : i32, i32
  }
  func.func @transform_4(%arg0: i32) -> (i32, i32) {
    %c0_i32 = arith.constant 0 : i32
    %c0_i32_0 = arith.constant 0 : i32
    %c0_i32_1 = arith.constant 0 : i32
    return %c0_i32, %c0_i32_0 : i32, i32
  }
  func.func @transform_5(%arg0: i32) -> (i32, i32) {
    %c0_i32 = arith.constant 0 : i32
    %c0_i32_0 = arith.constant 0 : i32
    %c0_i32_1 = arith.constant 0 : i32
    return %c0_i32, %c0_i32_0 : i32, i32
  }
  func.func @transform_6(%arg0: i32) -> (i32, i32) {
    %c0_i32 = arith.constant 0 : i32
    %c0_i32_0 = arith.constant 0 : i32
    %c0_i32_1 = arith.constant 0 : i32
    return %c0_i32, %c0_i32_0 : i32, i32
  }
  func.func @transform_7(%arg0: i32) -> (i32, i32) {
    %c0_i32 = arith.constant 0 : i32
    %c0_i32_0 = arith.constant 0 : i32
    %c0_i32_1 = arith.constant 0 : i32
    return %c0_i32, %c0_i32_0 : i32, i32
  }
  func.func @transform_8(%arg0: i32) -> (i32, i32) {
    %c0_i32 = arith.constant 0 : i32
    %c0_i32_0 = arith.constant 0 : i32
    %c0_i32_1 = arith.constant 0 : i32
    return %c0_i32, %c0_i32_0 : i32, i32
  }
  func.func @transform_9(%arg0: i32) -> (i32, i32, i32) {
    %c0_i32 = arith.constant 0 : i32
    %c0_i32_0 = arith.constant 0 : i32
    %c0_i32_1 = arith.constant 0 : i32
    return %arg0, %c0_i32, %c0_i32_0 : i32, i32, i32
  }
}

</mosaic_0001>

<llo_original>
// kernel: dgfmb_forward.1
$region0: #{dgfmb_forward.1}
  #allocation0 [shape = 'u32[]', space=smem, size = 0x4, offset = 0x4, fixed_abs, tag = 'smem constant byte address 0x4 - core index']
  #allocation1 [shape = 'u32[144,128]{1,0:T(1,128)}', space=vmem, size = 0x12000, scoped, tag = 'internal scratch']
  %s0 = inlined_call_operand.vmem [shape: f32[2,64,256], index: 0, kind: input, shape index: {}]
  %s1 = inlined_call_operand.vmem [shape: f32[2,256,1], index: 1, kind: input, shape index: {}]
  %s2 = inlined_call_operand.vmem [shape: f32[64,256], index: 2, kind: input, shape index: {}]
  %s3 = inlined_call_operand.vmem [shape: f32[64,1], index: 3, kind: input, shape index: {}]
  %s4 = inlined_call_operand.vmem [shape: f32[96,64], index: 4, kind: input, shape index: {}]
  %s5 = inlined_call_operand.vmem [shape: f32[96,64], index: 5, kind: input, shape index: {}]
  %s6 = inlined_call_operand.vmem [shape: f32[96,1], index: 6, kind: input, shape index: {}]
  %s7 = inlined_call_operand.vmem [shape: f32[64,96], index: 7, kind: input, shape index: {}]
  %s8 = inlined_call_operand.vmem [shape: f32[64,1], index: 8, kind: input, shape index: {}]
  %s9 = inlined_call_operand.vmem [shape: f32[2,64,256], index: 9, kind: output, shape index: {}]
  %s10 = sld [smem:[#allocation0]]
  $region69: #{dgfmb_forward.1} parent=0
    _
  %s12 = ssub.s32 1, %s10
  %s13 = scalar_select 0, %s12, %s10
  loop: start=0, step=1, limit=4
  $region2: #{dgfmb_forward.1} parent=0 // loop_pre_header
    _
  $region3: #{dgfmb_forward.1} parent=0 // loop_header
    %s15 = sphi 0, %s19
    %p16 = scmp.ge.s32.totalorder %s15, 4
    %s25 = sphi 0, %s27
    %s28 = sphi 0, %s25
    %s29 = sphi 0, %s28
    %s45 = sphi 0, %s29
    %s51 = sphi 0, %s53
    %s54 = sphi 0, %s51
    %s55 = sphi 0, %s54
    %s71 = sphi 0, %s55
    %s75 = sphi 0, %s75
    %s77 = sphi 0, %s75
    %s78 = sphi 0, %s77
    %s92 = sphi 0, %s78
    %s96 = sphi 0, %s96
    %s98 = sphi 0, %s96
    %s99 = sphi 0, %s98
    %s113 = sphi 0, %s99
    %s117 = sphi 0, %s117
    %s119 = sphi 0, %s117
    %s120 = sphi 0, %s119
    %s134 = sphi 0, %s120
    %s138 = sphi 0, %s138
    %s140 = sphi 0, %s138
    %s141 = sphi 0, %s140
    %s155 = sphi 0, %s141
    %s159 = sphi 0, %s159
    %s161 = sphi 0, %s159
    %s162 = sphi 0, %s161
    %s176 = sphi 0, %s162
    %s180 = sphi 0, %s180
    %s182 = sphi 0, %s180
    %s183 = sphi 0, %s182
    %s197 = sphi 0, %s183
    %s201 = sphi 0, %s201
    %s203 = sphi 0, %s201
    %s204 = sphi 0, %s203
    %s218 = sphi 0, %s204
    %s224 = sphi 0, %s226
    %s227 = sphi 0, %s224
    %s228 = sphi 0, %s227
    %s244 = sphi 0, %s228
  $region4: #{dgfmb_forward.1} parent=0 // loop_header_branch
    %18 = sbr.rel (%p16) target = $region8
  $region5: #{dgfmb_forward.1} parent=0 // loop_body
    %s20 = ssub.s32 %s15, 1
    %s21 = ssub.s32 %s15, 2
    %s22 = sadd.s32 %s15, 1
    %s23 = ssub.s32 %s15, %s22
    %p24 = scmp.eq.s32.totalorder %s23, 0
    %s26 = sadd.s32 %s25, 1
    %s27 = scalar_select %p24, %s25, %s26
    %p30 = pneg %p24
    %p31 = scmp.eq.s32.totalorder %s15, 1
    %p32 = por %p30, %p31
    %p33 = scmp.ne.s32.totalorder %s25, %s28
    %p34 = scmp.eq.s32.totalorder %s15, 0
    %p35 = por %p33, %p34
    %p36 = scmp.ne.s32.totalorder %s25, %s28
    %p37 = scmp.eq.s32.totalorder %s20, 1
    %p38 = por %p36, %p37
    %p39 = scmp.ne.s32.totalorder %s28, %s29
    %p40 = scmp.eq.s32.totalorder %s20, 0
    %p41 = por %p39, %p40
    %p42 = scmp.ne.s32.totalorder %s28, %s29
    %p43 = scmp.eq.s32.totalorder %s21, 1
    %p44 = por %p42, %p43
    %p46 = scmp.ne.s32.totalorder %s29, %s45
    %p47 = scmp.eq.s32.totalorder %s21, 0
    %p48 = por %p46, %p47
    %s49 = ssub.s32 %s15, %s22
    %p50 = scmp.eq.s32.totalorder %s49, 0
    %s52 = sadd.s32 %s51, 1
    %s53 = scalar_select %p50, %s51, %s52
    %p56 = pneg %p50
    %p57 = scmp.eq.s32.totalorder %s15, 1
    %p58 = por %p56, %p57
    %p59 = scmp.ne.s32.totalorder %s51, %s54
    %p60 = scmp.eq.s32.totalorder %s15, 0
    %p61 = por %p59, %p60
    %p62 = scmp.ne.s32.totalorder %s51, %s54
    %p63 = scmp.eq.s32.totalorder %s20, 1
    %p64 = por %p62, %p63
    %p65 = scmp.ne.s32.totalorder %s54, %s55
    %p66 = scmp.eq.s32.totalorder %s20, 0
    %p67 = por %p65, %p66
    %p68 = scmp.ne.s32.totalorder %s54, %s55
    %p69 = scmp.eq.s32.totalorder %s21, 1
    %p70 = por %p68, %p69
    %p72 = scmp.ne.s32.totalorder %s55, %s71
    %p73 = scmp.eq.s32.totalorder %s21, 0
    %p74 = por %p72, %p73
    %s76 = sadd.s32 %s75, 1
    %p79 = scmp.eq.s32.totalorder %s15, 1
    %p80 = scmp.ne.s32.totalorder %s75, %s77
    %p81 = scmp.eq.s32.totalorder %s15, 0
    %p82 = por %p80, %p81
    %p83 = scmp.ne.s32.totalorder %s75, %s77
    %p84 = scmp.eq.s32.totalorder %s20, 1
    %p85 = por %p83, %p84
    %p86 = scmp.ne.s32.totalorder %s77, %s78
    %p87 = scmp.eq.s32.totalorder %s20, 0
    %p88 = por %p86, %p87
    %p89 = scmp.ne.s32.totalorder %s77, %s78
    %p90 = scmp.eq.s32.totalorder %s21, 1
    %p91 = por %p89, %p90
    %p93 = scmp.ne.s32.totalorder %s78, %s92
    %p94 = scmp.eq.s32.totalorder %s21, 0
    %p95 = por %p93, %p94
    %s97 = sadd.s32 %s96, 1
    %p100 = scmp.eq.s32.totalorder %s15, 1
    %p101 = scmp.ne.s32.totalorder %s96, %s98
    %p102 = scmp.eq.s32.totalorder %s15, 0
    %p103 = por %p101, %p102
    %p104 = scmp.ne.s32.totalorder %s96, %s98
    %p105 = scmp.eq.s32.totalorder %s20, 1
    %p106 = por %p104, %p105
    %p107 = scmp.ne.s32.totalorder %s98, %s99
    %p108 = scmp.eq.s32.totalorder %s20, 0
    %p109 = por %p107, %p108
    %p110 = scmp.ne.s32.totalorder %s98, %s99
    %p111 = scmp.eq.s32.totalorder %s21, 1
    %p112 = por %p110, %p111
    %p114 = scmp.ne.s32.totalorder %s99, %s113
    %p115 = scmp.eq.s32.totalorder %s21, 0
    %p116 = por %p114, %p115
    %s118 = sadd.s32 %s117, 1
    %p121 = scmp.eq.s32.totalorder %s15, 1
    %p122 = scmp.ne.s32.totalorder %s117, %s119
    %p123 = scmp.eq.s32.totalorder %s15, 0
    %p124 = por %p122, %p123
    %p125 = scmp.ne.s32.totalorder %s117, %s119
    %p126 = scmp.eq.s32.totalorder %s20, 1
    %p127 = por %p125, %p126
    %p128 = scmp.ne.s32.totalorder %s119, %s120
    %p129 = scmp.eq.s32.totalorder %s20, 0
    %p130 = por %p128, %p129
    %p131 = scmp.ne.s32.totalorder %s119, %s120
    %p132 = scmp.eq.s32.totalorder %s21, 1
    %p133 = por %p131, %p132
    %p135 = scmp.ne.s32.totalorder %s120, %s134
    %p136 = scmp.eq.s32.totalorder %s21, 0
    %p137 = por %p135, %p136
    %s139 = sadd.s32 %s138, 1
    %p142 = scmp.eq.s32.totalorder %s15, 1
    %p143 = scmp.ne.s32.totalorder %s138, %s140
    %p144 = scmp.eq.s32.totalorder %s15, 0
    %p145 = por %p143, %p144
    %p146 = scmp.ne.s32.totalorder %s138, %s140
    %p147 = scmp.eq.s32.totalorder %s20, 1
    %p148 = por %p146, %p147
    %p149 = scmp.ne.s32.totalorder %s140, %s141
    %p150 = scmp.eq.s32.totalorder %s20, 0
    %p151 = por %p149, %p150
    %p152 = scmp.ne.s32.totalorder %s140, %s141
    %p153 = scmp.eq.s32.totalorder %s21, 1
    %p154 = por %p152, %p153
    %p156 = scmp.ne.s32.totalorder %s141, %s155
    %p157 = scmp.eq.s32.totalorder %s21, 0
    %p158 = por %p156, %p157
    %s160 = sadd.s32 %s159, 1
    %p163 = scmp.eq.s32.totalorder %s15, 1
    %p164 = scmp.ne.s32.totalorder %s159, %s161
    %p165 = scmp.eq.s32.totalorder %s15, 0
    %p166 = por %p164, %p165
    %p167 = scmp.ne.s32.totalorder %s159, %s161
    %p168 = scmp.eq.s32.totalorder %s20, 1
    %p169 = por %p167, %p168
    %p170 = scmp.ne.s32.totalorder %s161, %s162
    %p171 = scmp.eq.s32.totalorder %s20, 0
    %p172 = por %p170, %p171
    %p173 = scmp.ne.s32.totalorder %s161, %s162
    %p174 = scmp.eq.s32.totalorder %s21, 1
    %p175 = por %p173, %p174
    %p177 = scmp.ne.s32.totalorder %s162, %s176
    %p178 = scmp.eq.s32.totalorder %s21, 0
    %p179 = por %p177, %p178
    %s181 = sadd.s32 %s180, 1
    %p184 = scmp.eq.s32.totalorder %s15, 1
    %p185 = scmp.ne.s32.totalorder %s180, %s182
    %p186 = scmp.eq.s32.totalorder %s15, 0
    %p187 = por %p185, %p186
    %p188 = scmp.ne.s32.totalorder %s180, %s182
    %p189 = scmp.eq.s32.totalorder %s20, 1
    %p190 = por %p188, %p189
    %p191 = scmp.ne.s32.totalorder %s182, %s183
    %p192 = scmp.eq.s32.totalorder %s20, 0
    %p193 = por %p191, %p192
    %p194 = scmp.ne.s32.totalorder %s182, %s183
    %p195 = scmp.eq.s32.totalorder %s21, 1
    %p196 = por %p194, %p195
    %p198 = scmp.ne.s32.totalorder %s183, %s197
    %p199 = scmp.eq.s32.totalorder %s21, 0
    %p200 = por %p198, %p199
    %s202 = sadd.s32 %s201, 1
    %p205 = scmp.eq.s32.totalorder %s15, 1
    %p206 = scmp.ne.s32.totalorder %s201, %s203
    %p207 = scmp.eq.s32.totalorder %s15, 0
    %p208 = por %p206, %p207
    %p209 = scmp.ne.s32.totalorder %s201, %s203
    %p210 = scmp.eq.s32.totalorder %s20, 1
    %p211 = por %p209, %p210
    %p212 = scmp.ne.s32.totalorder %s203, %s204
    %p213 = scmp.eq.s32.totalorder %s20, 0
    %p214 = por %p212, %p213
    %p215 = scmp.ne.s32.totalorder %s203, %s204
    %p216 = scmp.eq.s32.totalorder %s21, 1
    %p217 = por %p215, %p216
    %p219 = scmp.ne.s32.totalorder %s204, %s218
    %p220 = scmp.eq.s32.totalorder %s21, 0
    %p221 = por %p219, %p220
    %s222 = ssub.s32 %s15, %s22
    %p223 = scmp.eq.s32.totalorder %s222, 0
    %s225 = sadd.s32 %s224, 1
    %s226 = scalar_select %p223, %s224, %s225
    %p229 = pneg %p223
    %p230 = scmp.eq.s32.totalorder %s15, 1
    %p231 = por %p229, %p230
    %p232 = scmp.ne.s32.totalorder %s224, %s227
    %p233 = scmp.eq.s32.totalorder %s15, 0
    %p234 = por %p232, %p233
    %p235 = scmp.ne.s32.totalorder %s224, %s227
    %p236 = scmp.eq.s32.totalorder %s20, 1
    %p237 = por %p235, %p236
    %p238 = scmp.ne.s32.totalorder %s227, %s228
    %p239 = scmp.eq.s32.totalorder %s20, 0
    %p240 = por %p238, %p239
    %p241 = scmp.ne.s32.totalorder %s227, %s228
    %p242 = scmp.eq.s32.totalorder %s21, 1
    %p243 = por %p241, %p242
    %p245 = scmp.ne.s32.totalorder %s228, %s244
    %p246 = scmp.eq.s32.totalorder %s21, 0
    %p247 = por %p245, %p246
    %p248 = scmp.le.s32.totalorder 1, %s15
    %p249 = scmp.lt.s32.totalorder %s15, 3
    %p250 = pnand %p248, %p249
    %p251 = pneg %p250
    // Predicated region
    $region9: #{dgfmb_forward.1} parent=5 // pred_check
      _
    $region10: #{dgfmb_forward.1} parent=5 // pred_check_branch
      %253 = sbr.rel (%p250) target = $region12
    $region11: #{dgfmb_forward.1} parent=5 // pred_region
      %s254 = ssub.s32 %s15, 1
      // Predicated region
      $region13: #{dgfmb_forward.1} parent=11 // pred_check
        %p255 = pneg %p88
      $region14: #{dgfmb_forward.1} parent=11 // pred_check_branch
        %257 = sbr.rel (%p255) target = $region16
      $region15: #{dgfmb_forward.1} parent=11 // pred_region
        _
      $region16: #{dgfmb_forward.1} parent=11 // pred_fallthru
        _
      // Predicated region
      $region17: #{dgfmb_forward.1} parent=11 // pred_check
        %p258 = pneg %p109
      $region18: #{dgfmb_forward.1} parent=11 // pred_check_branch
        %260 = sbr.rel (%p258) target = $region20
      $region19: #{dgfmb_forward.1} parent=11 // pred_region
        _
      $region20: #{dgfmb_forward.1} parent=11 // pred_fallthru
        _
      // Predicated region
      $region21: #{dgfmb_forward.1} parent=11 // pred_check
        %p261 = pneg %p130
      $region22: #{dgfmb_forward.1} parent=11 // pred_check_branch
        %263 = sbr.rel (%p261) target = $region24
      $region23: #{dgfmb_forward.1} parent=11 // pred_region
        _
      $region24: #{dgfmb_forward.1} parent=11 // pred_fallthru
        _
      // Predicated region
      $region25: #{dgfmb_forward.1} parent=11 // pred_check
        %p264 = pneg %p151
      $region26: #{dgfmb_forward.1} parent=11 // pred_check_branch
        %266 = sbr.rel (%p264) target = $region28
      $region27: #{dgfmb_forward.1} parent=11 // pred_region
        _
      $region28: #{dgfmb_forward.1} parent=11 // pred_fallthru
        _
      // Predicated region
      $region29: #{dgfmb_forward.1} parent=11 // pred_check
        %p267 = pneg %p172
      $region30: #{dgfmb_forward.1} parent=11 // pred_check_branch
        %269 = sbr.rel (%p267) target = $region32
      $region31: #{dgfmb_forward.1} parent=11 // pred_region
        _
      $region32: #{dgfmb_forward.1} parent=11 // pred_fallthru
        _
      // Predicated region
      $region33: #{dgfmb_forward.1} parent=11 // pred_check
        %p270 = pneg %p193
      $region34: #{dgfmb_forward.1} parent=11 // pred_check_branch
        %272 = sbr.rel (%p270) target = $region36
      $region35: #{dgfmb_forward.1} parent=11 // pred_region
        _
      $region36: #{dgfmb_forward.1} parent=11 // pred_fallthru
        _
      // Predicated region
      $region37: #{dgfmb_forward.1} parent=11 // pred_check
        %p273 = pneg %p214
      $region38: #{dgfmb_forward.1} parent=11 // pred_check_branch
        %275 = sbr.rel (%p273) target = $region40
      $region39: #{dgfmb_forward.1} parent=11 // pred_region
        _
      $region40: #{dgfmb_forward.1} parent=11 // pred_fallthru
        _
    $region12: #{dgfmb_forward.1} parent=5 // pred_fallthru
      _
    %p276 = scmp.lt.s32.totalorder %s15, 2
    // Predicated region
    $region41: #{dgfmb_forward.1} parent=5 // pred_check
      %p277 = pneg %p276
    $region42: #{dgfmb_forward.1} parent=5 // pred_check_branch
      %279 = sbr.rel (%p277) target = $region44
    $region43: #{dgfmb_forward.1} parent=5 // pred_region
      // Predicated region
      $region45: #{dgfmb_forward.1} parent=43 // pred_check
        %p280 = pneg %p35
      $region46: #{dgfmb_forward.1} parent=43 // pred_check_branch
        %282 = sbr.rel (%p280) target = $region48
      $region47: #{dgfmb_forward.1} parent=43 // pred_region
        %p283 = scmp.lt.s32.totalorder %s15, 1
        %s284 = scalar_select %p283, %s15, 1
        %s285 = smul.addr %s284, 16
        %s286 = smul.addr %s285, 8
        %s287 = scalar_lea.vmem %s0, %s286
      $region48: #{dgfmb_forward.1} parent=43 // pred_fallthru
        _
      // Predicated region
      $region49: #{dgfmb_forward.1} parent=43 // pred_check
        %p288 = pneg %p61
      $region50: #{dgfmb_forward.1} parent=43 // pred_check_branch
        %290 = sbr.rel (%p288) target = $region52
      $region51: #{dgfmb_forward.1} parent=43 // pred_region
        %p291 = scmp.lt.s32.totalorder %s15, 1
        %s292 = scalar_select %p291, %s15, 1
        %s293 = smul.addr %s292, 32
        %s294 = smul.addr %s293, 8
        %s295 = scalar_lea.vmem %s1, %s294
      $region52: #{dgfmb_forward.1} parent=43 // pred_fallthru
        _
    $region44: #{dgfmb_forward.1} parent=5 // pred_fallthru
      _
    %p296 = scmp.le.s32.totalorder 1, %s15
    %p297 = scmp.lt.s32.totalorder %s15, 3
    %p298 = pnand %p296, %p297
    %p299 = pneg %p298
    // Predicated region
    $region53: #{dgfmb_forward.1} parent=5 // pred_check
      _
    $region54: #{dgfmb_forward.1} parent=5 // pred_check_branch
      %301 = sbr.rel (%p298) target = $region56
    $region55: #{dgfmb_forward.1} parent=5 // pred_region
      %s302 = ssub.s32 %s15, 1
      %p303 = scmp.lt.s32.totalorder %s20, 1
      %s304 = scalar_select %p303, %s20, 1
      %s305 = smul.addr %s304, 16
      %s306 = smul.addr %s305, 8
      %s307 = scalar_lea.vmem %s0, %s306
      %p308 = pneg %p41
      %p309 = pneg %p38
      %p310 = scmp.lt.s32.totalorder %s20, 1
      %s311 = scalar_select %p310, %s20, 1
      %s312 = smul.addr %s311, 32
      %s313 = smul.addr %s312, 8
      %s314 = scalar_lea.vmem %s1, %s313
      %p315 = pneg %p67
      %p316 = pneg %p64
      %p317 = pneg %p88
      %p318 = pneg %p85
      %p319 = pneg %p109
      %p320 = pneg %p106
      %p321 = pneg %p130
      %p322 = pneg %p127
      %p323 = pneg %p151
      %p324 = pneg %p148
      %p325 = pneg %p172
      %p326 = pneg %p169
      %p327 = pneg %p193
      %p328 = pneg %p190
      %p329 = pneg %p214
      %p330 = pneg %p211
      %p331 = pneg %p240
      %p332 = pneg %p237
      %p333 = scmp.lt.s32.totalorder %s20, 1
      %s334 = scalar_select %p333, %s20, 1
      %s335 = smul.addr %s334, 16
      %s336 = smul.addr %s335, 8
      %s337 = scalar_lea.vmem %s9, %s336
      %p338 = scmp.lt.s32.totalorder %s20, 1
      %s339 = scalar_select %p338, %s20, 1
      %s340 = smul.addr %s339, 16
      %s341 = smul.addr %s340, 8
      %s342 = scalar_lea.vmem %s0, %s341
      %p343 = scmp.lt.s32.totalorder %s20, 1
      %s344 = scalar_select %p343, %s20, 1
      %s345 = smul.addr %s344, 32
      %s346 = smul.addr %s345, 8
      %s347 = scalar_lea.vmem %s1, %s346
      %p348 = scmp.lt.s32.totalorder %s20, 1
      %s349 = scalar_select %p348, %s20, 1
      %s350 = smul.addr %s349, 16
      %s351 = smul.addr %s350, 8
      %s352 = scalar_lea.vmem %s9, %s351
      %v353 = vld [vmem:[%s342] sm:$0xff]
      %v354 = vld [vmem:[%s342 + $0x8] sm:$0xff]
      %v355 = vld [vmem:[%s342 + $0x10] sm:$0xff]
      %v356 = vld [vmem:[%s342 + $0x18] sm:$0xff]
      %v357 = vld [vmem:[%s342 + $0x20] sm:$0xff]
      %v358 = vld [vmem:[%s342 + $0x28] sm:$0xff]
      %v359 = vld [vmem:[%s342 + $0x30] sm:$0xff]
      %v360 = vld [vmem:[%s342 + $0x38] sm:$0xff]
      %v361 = vld [vmem:[%s342 + $0x40] sm:$0xff]
      %v362 = vld [vmem:[%s342 + $0x48] sm:$0xff]
      %v363 = vld [vmem:[%s342 + $0x50] sm:$0xff]
      %v364 = vld [vmem:[%s342 + $0x58] sm:$0xff]
      %v365 = vld [vmem:[%s342 + $0x60] sm:$0xff]
      %v366 = vld [vmem:[%s342 + $0x68] sm:$0xff]
      %v367 = vld [vmem:[%s342 + $0x70] sm:$0xff]
      %v368 = vld [vmem:[%s342 + $0x78] sm:$0xff]
      %v369 = vadd.f32 %v353, %v354
      %370 = vadd.xlane.f32.xlu0 %v369
      %v371 = vpop.xlane.xlu0 %370
      %v372 = vadd.f32 %v355, %v356
      %373 = vadd.xlane.f32.xlu0 %v372
      %v374 = vpop.xlane.xlu0 %373
      %v375 = vadd.f32 %v357, %v358
      %376 = vadd.xlane.f32.xlu0 %v375
      %v377 = vpop.xlane.xlu0 %376
      %v378 = vadd.f32 %v359, %v360
      %379 = vadd.xlane.f32.xlu0 %v378
      %v380 = vpop.xlane.xlu0 %379
      %v381 = vadd.f32 %v361, %v362
      %382 = vadd.xlane.f32.xlu0 %v381
      %v383 = vpop.xlane.xlu0 %382
      %v384 = vadd.f32 %v363, %v364
      %385 = vadd.xlane.f32.xlu0 %v384
      %v386 = vpop.xlane.xlu0 %385
      %v387 = vadd.f32 %v365, %v366
      %388 = vadd.xlane.f32.xlu0 %v387
      %v389 = vpop.xlane.xlu0 %388
      %v390 = vadd.f32 %v367, %v368
      %391 = vadd.xlane.f32.xlu0 %v390
      %v392 = vpop.xlane.xlu0 %391
      %v393 = vmul.f32 %v371, 0.00390625
      %v394 = vmul.f32 %v374, 0.00390625
      %v395 = vmul.f32 %v377, 0.00390625
      %v396 = vmul.f32 %v380, 0.00390625
      %v397 = vmul.f32 %v383, 0.00390625
      %v398 = vmul.f32 %v386, 0.00390625
      %v399 = vmul.f32 %v389, 0.00390625
      %v400 = vmul.f32 %v392, 0.00390625
      %v401 = vld [vmem:[%s347] sm:$0xff]
      %v402 = vld [vmem:[%s347 + $0x8] sm:$0xff]
      %v403 = vld [vmem:[%s347 + $0x10] sm:$0xff]
      %v404 = vld [vmem:[%s347 + $0x18] sm:$0xff]
      %v405 = vld [vmem:[%s347 + $0x20] sm:$0xff]
      %v406 = vld [vmem:[%s347 + $0x28] sm:$0xff]
      %v407 = vld [vmem:[%s347 + $0x30] sm:$0xff]
      %v408 = vld [vmem:[%s347 + $0x38] sm:$0xff]
      %v409 = vld [vmem:[%s347 + $0x40] sm:$0xff]
      %v410 = vld [vmem:[%s347 + $0x48] sm:$0xff]
      %v411 = vld [vmem:[%s347 + $0x50] sm:$0xff]
      %v412 = vld [vmem:[%s347 + $0x58] sm:$0xff]
      %v413 = vld [vmem:[%s347 + $0x60] sm:$0xff]
      %v414 = vld [vmem:[%s347 + $0x68] sm:$0xff]
      %v415 = vld [vmem:[%s347 + $0x70] sm:$0xff]
      %v416 = vld [vmem:[%s347 + $0x78] sm:$0xff]
      %v417 = vld [vmem:[%s347 + $0x80] sm:$0xff]
      %v418 = vld [vmem:[%s347 + $0x88] sm:$0xff]
      %v419 = vld [vmem:[%s347 + $0x90] sm:$0xff]
      %v420 = vld [vmem:[%s347 + $0x98] sm:$0xff]
      %v421 = vld [vmem:[%s347 + $0xa0] sm:$0xff]
      %v422 = vld [vmem:[%s347 + $0xa8] sm:$0xff]
      %v423 = vld [vmem:[%s347 + $0xb0] sm:$0xff]
      %v424 = vld [vmem:[%s347 + $0xb8] sm:$0xff]
      %v425 = vld [vmem:[%s347 + $0xc0] sm:$0xff]
      %v426 = vld [vmem:[%s347 + $0xc8] sm:$0xff]
      %v427 = vld [vmem:[%s347 + $0xd0] sm:$0xff]
      %v428 = vld [vmem:[%s347 + $0xd8] sm:$0xff]
      %v429 = vld [vmem:[%s347 + $0xe0] sm:$0xff]
      %v430 = vld [vmem:[%s347 + $0xe8] sm:$0xff]
      %v431 = vld [vmem:[%s347 + $0xf0] sm:$0xff]
      %v432 = vld [vmem:[%s347 + $0xf8] sm:$0xff]
      %v433 = vld [vmem:[%s2] sm:$0xff]
      %v434 = vld [vmem:[%s2 + $0x8] sm:$0xff]
      %v435 = vld [vmem:[%s2 + $0x10] sm:$0xff]
      %v436 = vld [vmem:[%s2 + $0x18] sm:$0xff]
      %v437 = vld [vmem:[%s2 + $0x20] sm:$0xff]
      %v438 = vld [vmem:[%s2 + $0x28] sm:$0xff]
      %v439 = vld [vmem:[%s2 + $0x30] sm:$0xff]
      %v440 = vld [vmem:[%s2 + $0x38] sm:$0xff]
      %v441 = vld [vmem:[%s2 + $0x40] sm:$0xff]
      %v442 = vld [vmem:[%s2 + $0x48] sm:$0xff]
      %v443 = vld [vmem:[%s2 + $0x50] sm:$0xff]
      %v444 = vld [vmem:[%s2 + $0x58] sm:$0xff]
      %v445 = vld [vmem:[%s2 + $0x60] sm:$0xff]
      %v446 = vld [vmem:[%s2 + $0x68] sm:$0xff]
      %v447 = vld [vmem:[%s2 + $0x70] sm:$0xff]
      %v448 = vld [vmem:[%s2 + $0x78] sm:$0xff]
      %v449 = vld [vmem:[%s3] sm:$0xff]
      %v450 = vld [vmem:[%s3 + $0x8] sm:$0xff]
      %v451 = vld [vmem:[%s3 + $0x10] sm:$0xff]
      %v452 = vld [vmem:[%s3 + $0x18] sm:$0xff]
      %v453 = vld [vmem:[%s3 + $0x20] sm:$0xff]
      %v454 = vld [vmem:[%s3 + $0x28] sm:$0xff]
      %v455 = vld [vmem:[%s3 + $0x30] sm:$0xff]
      %v456 = vld [vmem:[%s3 + $0x38] sm:$0xff]
      %457 = vmatprep.subr.mxu0 0.0
      %458 = vmatpush1.msra.mxu0 %v416
      %459 = vmatprep.subr.mxu0 0.0
      %460 = vmatpush1.msra.mxu0 %v415
      %461 = vmatprep.subr.mxu0 0.0
      %462 = vmatpush1.msra.mxu0 %v414
      %463 = vmatprep.subr.mxu0 0.0
      %464 = vmatpush1.msra.mxu0 %v413
      %465 = vmatprep.subr.mxu0 0.0
      %466 = vmatpush1.msra.mxu0 %v412
      %467 = vmatprep.subr.mxu0 0.0
      %468 = vmatpush1.msra.mxu0 %v411
      %469 = vmatprep.subr.mxu0 0.0
      %470 = vmatpush1.msra.mxu0 %v410
      %471 = vmatprep.subr.mxu0 0.0
      %472 = vmatpush1.msra.mxu0 %v409
      %473 = vmatprep.subr.mxu0 0.0
      %474 = vmatpush1.msra.mxu0 %v408
      %475 = vmatprep.subr.mxu0 0.0
      %476 = vmatpush1.msra.mxu0 %v407
      %477 = vmatprep.subr.mxu0 0.0
      %478 = vmatpush1.msra.mxu0 %v406
      %479 = vmatprep.subr.mxu0 0.0
      %480 = vmatpush1.msra.mxu0 %v405
      %481 = vmatprep.subr.mxu0 0.0
      %482 = vmatpush1.msra.mxu0 %v404
      %483 = vmatprep.subr.mxu0 0.0
      %484 = vmatpush1.msra.mxu0 %v403
      %485 = vmatprep.subr.mxu0 0.0
      %486 = vmatpush1.msra.mxu0 %v402
      %487 = vmatprep.subr.mxu0 0.0
      %488 = vmatpush1.msra.mxu0 %v401
      %489 = vmatprep.subr.mxu0 0.0
      %490 = vmatpush2.msra.mxu0 %v432
      %491 = vmatprep.subr.mxu0 0.0
      %492 = vmatpush2.msra.mxu0 %v431
      %493 = vmatprep.subr.mxu0 0.0
      %494 = vmatpush2.msra.mxu0 %v430
      %495 = vmatprep.subr.mxu0 0.0
      %496 = vmatpush2.msra.mxu0 %v429
      %497 = vmatprep.subr.mxu0 0.0
      %498 = vmatpush2.msra.mxu0 %v428
      %499 = vmatprep.subr.mxu0 0.0
      %500 = vmatpush2.msra.mxu0 %v427
      %501 = vmatprep.subr.mxu0 0.0
      %502 = vmatpush2.msra.mxu0 %v426
      %503 = vmatprep.subr.mxu0 0.0
      %504 = vmatpush2.msra.mxu0 %v425
      %505 = vmatprep.subr.mxu0 0.0
      %506 = vmatpush2.msra.mxu0 %v424
      %507 = vmatprep.subr.mxu0 0.0
      %508 = vmatpush2.msra.mxu0 %v423
      %509 = vmatprep.subr.mxu0 0.0
      %510 = vmatpush2.msra.mxu0 %v422
      %511 = vmatprep.subr.mxu0 0.0
      %512 = vmatpush2.msra.mxu0 %v421
      %513 = vmatprep.subr.mxu0 0.0
      %514 = vmatpush2.msra.mxu0 %v420
      %515 = vmatprep.subr.mxu0 0.0
      %516 = vmatpush2.msra.mxu0 %v419
      %517 = vmatprep.subr.mxu0 0.0
      %518 = vmatpush2.msra.mxu0 %v418
      %519 = vmatprep.subr.mxu0 0.0
      %520 = vmatpush2.msra.mxu0 %v417
      %521 = vmatprep.mubr.f32.mxu0 %v434
      %522 = vmatmul.mubr.f32.gmra.mxu0 %v433
      %v523 = vpop.f32.mrf.mxu0
      %v524 = vadd.f32 %v449, %v523
      %v525 = vpop.f32.mrf.mxu0
      %526 = vmatprep.mubr.f32.mxu0 %v436
      %527 = vmatmul.mubr.f32.gmra.mxu0 %v435
      %v528 = vpop.f32.mrf.mxu0
      %v529 = vadd.f32 %v450, %v528
      %v530 = vpop.f32.mrf.mxu0
      %531 = vmatprep.mubr.f32.mxu0 %v438
      %532 = vmatmul.mubr.f32.gmra.mxu0 %v437
      %v533 = vpop.f32.mrf.mxu0
      %v534 = vadd.f32 %v451, %v533
      %v535 = vpop.f32.mrf.mxu0
      %536 = vmatprep.mubr.f32.mxu0 %v440
      %537 = vmatmul.mubr.f32.gmra.mxu0 %v439
      %v538 = vpop.f32.mrf.mxu0
      %v539 = vadd.f32 %v452, %v538
      %v540 = vpop.f32.mrf.mxu0
      %541 = vmatprep.mubr.f32.mxu0 %v442
      %542 = vmatmul.mubr.f32.gmra.mxu0 %v441
      %v543 = vpop.f32.mrf.mxu0
      %v544 = vadd.f32 %v453, %v543
      %v545 = vpop.f32.mrf.mxu0
      %546 = vmatprep.mubr.f32.mxu0 %v444
      %547 = vmatmul.mubr.f32.gmra.mxu0 %v443
      %v548 = vpop.f32.mrf.mxu0
      %v549 = vadd.f32 %v454, %v548
      %v550 = vpop.f32.mrf.mxu0
      %551 = vmatprep.mubr.f32.mxu0 %v446
      %552 = vmatmul.mubr.f32.gmra.mxu0 %v445
      %v553 = vpop.f32.mrf.mxu0
      %v554 = vadd.f32 %v455, %v553
      %v555 = vpop.f32.mrf.mxu0
      %556 = vmatprep.mubr.f32.mxu0 %v448
      %557 = vmatmul.mubr.f32.gmra.mxu0 %v447
      %v558 = vpop.f32.mrf.mxu0
      %v559 = vadd.f32 %v456, %v558
      %v560 = vpop.f32.mrf.mxu0
      %561 = vdwg.mxu0
      %v562 = vld [vmem:[%s4] sm:$0xff]
      %v563 = vld [vmem:[%s4 + $0x8] sm:$0xff]
      %v564 = vld [vmem:[%s4 + $0x10] sm:$0xff]
      %v565 = vld [vmem:[%s4 + $0x18] sm:$0xff]
      %v566 = vld [vmem:[%s4 + $0x20] sm:$0xff]
      %v567 = vld [vmem:[%s4 + $0x28] sm:$0xff]
      %v568 = vld [vmem:[%s4 + $0x30] sm:$0xff]
      %v569 = vld [vmem:[%s4 + $0x38] sm:$0xff]
      %v570 = vld [vmem:[%s4 + $0x40] sm:$0xff]
      %v571 = vld [vmem:[%s4 + $0x48] sm:$0xff]
      %v572 = vld [vmem:[%s4 + $0x50] sm:$0xff]
      %v573 = vld [vmem:[%s4 + $0x58] sm:$0xff]
      %v574 = vld [vmem:[%s5] sm:$0xff]
      %v575 = vld [vmem:[%s5 + $0x8] sm:$0xff]
      %v576 = vld [vmem:[%s5 + $0x10] sm:$0xff]
      %v577 = vld [vmem:[%s5 + $0x18] sm:$0xff]
      %v578 = vld [vmem:[%s5 + $0x20] sm:$0xff]
      %v579 = vld [vmem:[%s5 + $0x28] sm:$0xff]
      %v580 = vld [vmem:[%s5 + $0x30] sm:$0xff]
      %v581 = vld [vmem:[%s5 + $0x38] sm:$0xff]
      %v582 = vld [vmem:[%s5 + $0x40] sm:$0xff]
      %v583 = vld [vmem:[%s5 + $0x48] sm:$0xff]
      %v584 = vld [vmem:[%s5 + $0x50] sm:$0xff]
      %v585 = vld [vmem:[%s5 + $0x58] sm:$0xff]
      %vm586 = vcmask 523264
      %v588 = vsel %vm586, %v574, 0
      %v591 = vsel %vm586, %v575, 0
      %v594 = vsel %vm586, %v576, 0
      %v597 = vsel %vm586, %v577, 0
      %v600 = vsel %vm586, %v578, 0
      %v603 = vsel %vm586, %v579, 0
      %v606 = vsel %vm586, %v580, 0
      %v609 = vsel %vm586, %v581, 0
      %v612 = vsel %vm586, %v582, 0
      %v615 = vsel %vm586, %v583, 0
      %v618 = vsel %vm586, %v584, 0
      %v621 = vsel %vm586, %v585, 0
      %623 = vmatprep.subr.mxu0 0.0
      %624 = vmatpush1.msra.mxu0 0.0
      %625 = vmatprep.subr.mxu0 0.0
      %626 = vmatpush1.msra.mxu0 0.0
      %627 = vmatprep.subr.mxu0 0.0
      %628 = vmatpush1.msra.mxu0 0.0
      %629 = vmatprep.subr.mxu0 0.0
      %630 = vmatpush1.msra.mxu0 0.0
      %631 = vmatprep.subr.mxu0 0.0
      %632 = vmatpush1.msra.mxu0 0.0
      %633 = vmatprep.subr.mxu0 0.0
      %634 = vmatpush1.msra.mxu0 0.0
      %635 = vmatprep.subr.mxu0 0.0
      %636 = vmatpush1.msra.mxu0 0.0
      %637 = vmatprep.subr.mxu0 0.0
      %638 = vmatpush1.msra.mxu0 0.0
      %639 = vmatprep.subr.mxu0 0.0
      %640 = vmatpush1.msra.mxu0 %v559
      %641 = vmatprep.subr.mxu0 0.0
      %642 = vmatpush1.msra.mxu0 %v554
      %643 = vmatprep.subr.mxu0 0.0
      %644 = vmatpush1.msra.mxu0 %v549
      %645 = vmatprep.subr.mxu0 0.0
      %646 = vmatpush1.msra.mxu0 %v544
      %647 = vmatprep.subr.mxu0 0.0
      %648 = vmatpush1.msra.mxu0 %v539
      %649 = vmatprep.subr.mxu0 0.0
      %650 = vmatpush1.msra.mxu0 %v534
      %651 = vmatprep.subr.mxu0 0.0
      %652 = vmatpush1.msra.mxu0 %v529
      %653 = vmatprep.subr.mxu0 0.0
      %654 = vmatpush1.msra.mxu0 %v524
      %655 = vmatprep.subr.mxu0 0.0
      %656 = vmatpush2.msra.mxu0 0.0
      %657 = vmatprep.subr.mxu0 0.0
      %658 = vmatpush2.msra.mxu0 0.0
      %659 = vmatprep.subr.mxu0 0.0
      %660 = vmatpush2.msra.mxu0 0.0
      %661 = vmatprep.subr.mxu0 0.0
      %662 = vmatpush2.msra.mxu0 0.0
      %663 = vmatprep.subr.mxu0 0.0
      %664 = vmatpush2.msra.mxu0 0.0
      %665 = vmatprep.subr.mxu0 0.0
      %666 = vmatpush2.msra.mxu0 0.0
      %667 = vmatprep.subr.mxu0 0.0
      %668 = vmatpush2.msra.mxu0 0.0
      %669 = vmatprep.subr.mxu0 0.0
      %670 = vmatpush2.msra.mxu0 0.0
      %671 = vmatprep.subr.mxu0 0.0
      %672 = vmatpush2.msra.mxu0 0.0
      %673 = vmatprep.subr.mxu0 0.0
      %674 = vmatpush2.msra.mxu0 0.0
      %675 = vmatprep.subr.mxu0 0.0
      %676 = vmatpush2.msra.mxu0 0.0
      %677 = vmatprep.subr.mxu0 0.0
      %678 = vmatpush2.msra.mxu0 0.0
      %679 = vmatprep.subr.mxu0 0.0
      %680 = vmatpush2.msra.mxu0 0.0
      %681 = vmatprep.subr.mxu0 0.0
      %682 = vmatpush2.msra.mxu0 0.0
      %683 = vmatprep.subr.mxu0 0.0
      %684 = vmatpush2.msra.mxu0 0.0
      %685 = vmatprep.subr.mxu0 0.0
      %686 = vmatpush2.msra.mxu0 0.0
      %687 = vmatprep.mubr.f32.mxu0 0.0
      %688 = vmatmul.mubr.f32.gmra.mxu0 %v588
      %v689 = vpop.f32.mrf.mxu0
      %v690 = vadd.f32 0.0, %v689
      %v691 = vpop.f32.mrf.mxu0
      %692 = vmatprep.mubr.f32.mxu0 0.0
      %693 = vmatmul.mubr.f32.gmra.mxu0 %v591
      %v694 = vpop.f32.mrf.mxu0
      %v695 = vadd.f32 0.0, %v694
      %v696 = vpop.f32.mrf.mxu0
      %697 = vmatprep.mubr.f32.mxu0 0.0
      %698 = vmatmul.mubr.f32.gmra.mxu0 %v594
      %v699 = vpop.f32.mrf.mxu0
      %v700 = vadd.f32 0.0, %v699
      %v701 = vpop.f32.mrf.mxu0
      %702 = vmatprep.mubr.f32.mxu0 0.0
      %703 = vmatmul.mubr.f32.gmra.mxu0 %v597
      %v704 = vpop.f32.mrf.mxu0
      %v705 = vadd.f32 0.0, %v704
      %v706 = vpop.f32.mrf.mxu0
      %707 = vmatprep.mubr.f32.mxu0 0.0
      %708 = vmatmul.mubr.f32.gmra.mxu0 %v600
      %v709 = vpop.f32.mrf.mxu0
      %v710 = vadd.f32 0.0, %v709
      %v711 = vpop.f32.mrf.mxu0
      %712 = vmatprep.mubr.f32.mxu0 0.0
      %713 = vmatmul.mubr.f32.gmra.mxu0 %v603
      %v714 = vpop.f32.mrf.mxu0
      %v715 = vadd.f32 0.0, %v714
      %v716 = vpop.f32.mrf.mxu0
      %717 = vmatprep.mubr.f32.mxu0 0.0
      %718 = vmatmul.mubr.f32.gmra.mxu0 %v606
      %v719 = vpop.f32.mrf.mxu0
      %v720 = vadd.f32 0.0, %v719
      %v721 = vpop.f32.mrf.mxu0
      %722 = vmatprep.mubr.f32.mxu0 0.0
      %723 = vmatmul.mubr.f32.gmra.mxu0 %v609
      %v724 = vpop.f32.mrf.mxu0
      %v725 = vadd.f32 0.0, %v724
      %v726 = vpop.f32.mrf.mxu0
      %727 = vmatprep.mubr.f32.mxu0 0.0
      %728 = vmatmul.mubr.f32.gmra.mxu0 %v612
      %v729 = vpop.f32.mrf.mxu0
      %v730 = vadd.f32 0.0, %v729
      %v731 = vpop.f32.mrf.mxu0
      %732 = vmatprep.mubr.f32.mxu0 0.0
      %733 = vmatmul.mubr.f32.gmra.mxu0 %v615
      %v734 = vpop.f32.mrf.mxu0
      %v735 = vadd.f32 0.0, %v734
      %v736 = vpop.f32.mrf.mxu0
      %737 = vmatprep.mubr.f32.mxu0 0.0
      %738 = vmatmul.mubr.f32.gmra.mxu0 %v618
      %v739 = vpop.f32.mrf.mxu0
      %v740 = vadd.f32 0.0, %v739
      %v741 = vpop.f32.mrf.mxu0
      %742 = vmatprep.mubr.f32.mxu0 0.0
      %743 = vmatmul.mubr.f32.gmra.mxu0 %v621
      %v744 = vpop.f32.mrf.mxu0
      %v745 = vadd.f32 0.0, %v744
      %v746 = vpop.f32.mrf.mxu0
      %747 = vdwg.mxu0
      %v749 = vsel %vm586, %v562, 0
      %v752 = vsel %vm586, %v563, 0
      %v755 = vsel %vm586, %v564, 0
      %v758 = vsel %vm586, %v565, 0
      %v761 = vsel %vm586, %v566, 0
      %v764 = vsel %vm586, %v567, 0
      %v767 = vsel %vm586, %v568, 0
      %v770 = vsel %vm586, %v569, 0
      %v773 = vsel %vm586, %v570, 0
      %v776 = vsel %vm586, %v571, 0
      %v779 = vsel %vm586, %v572, 0
      %v782 = vsel %vm586, %v573, 0
      %784 = vmatprep.subr.mxu0 0.0
      %785 = vmatpush1.msra.mxu0 0.0
      %786 = vmatprep.subr.mxu0 0.0
      %787 = vmatpush1.msra.mxu0 0.0
      %788 = vmatprep.subr.mxu0 0.0
      %789 = vmatpush1.msra.mxu0 0.0
      %790 = vmatprep.subr.mxu0 0.0
      %791 = vmatpush1.msra.mxu0 0.0
      %792 = vmatprep.subr.mxu0 0.0
      %793 = vmatpush1.msra.mxu0 0.0
      %794 = vmatprep.subr.mxu0 0.0
      %795 = vmatpush1.msra.mxu0 0.0
      %796 = vmatprep.subr.mxu0 0.0
      %797 = vmatpush1.msra.mxu0 0.0
      %798 = vmatprep.subr.mxu0 0.0
      %799 = vmatpush1.msra.mxu0 0.0
      %800 = vmatprep.subr.mxu0 0.0
      %801 = vmatpush1.msra.mxu0 %v400
      %802 = vmatprep.subr.mxu0 0.0
      %803 = vmatpush1.msra.mxu0 %v399
      %804 = vmatprep.subr.mxu0 0.0
      %805 = vmatpush1.msra.mxu0 %v398
      %806 = vmatprep.subr.mxu0 0.0
      %807 = vmatpush1.msra.mxu0 %v397
      %808 = vmatprep.subr.mxu0 0.0
      %809 = vmatpush1.msra.mxu0 %v396
      %810 = vmatprep.subr.mxu0 0.0
      %811 = vmatpush1.msra.mxu0 %v395
      %812 = vmatprep.subr.mxu0 0.0
      %813 = vmatpush1.msra.mxu0 %v394
      %814 = vmatprep.subr.mxu0 0.0
      %815 = vmatpush1.msra.mxu0 %v393
      %816 = vmatprep.subr.mxu0 0.0
      %817 = vmatpush2.msra.mxu0 0.0
      %818 = vmatprep.subr.mxu0 0.0
      %819 = vmatpush2.msra.mxu0 0.0
      %820 = vmatprep.subr.mxu0 0.0
      %821 = vmatpush2.msra.mxu0 0.0
      %822 = vmatprep.subr.mxu0 0.0
      %823 = vmatpush2.msra.mxu0 0.0
      %824 = vmatprep.subr.mxu0 0.0
      %825 = vmatpush2.msra.mxu0 0.0
      %826 = vmatprep.subr.mxu0 0.0
      %827 = vmatpush2.msra.mxu0 0.0
      %828 = vmatprep.subr.mxu0 0.0
      %829 = vmatpush2.msra.mxu0 0.0
      %830 = vmatprep.subr.mxu0 0.0
      %831 = vmatpush2.msra.mxu0 0.0
      %832 = vmatprep.subr.mxu0 0.0
      %833 = vmatpush2.msra.mxu0 0.0
      %834 = vmatprep.subr.mxu0 0.0
      %835 = vmatpush2.msra.mxu0 0.0
      %836 = vmatprep.subr.mxu0 0.0
      %837 = vmatpush2.msra.mxu0 0.0
      %838 = vmatprep.subr.mxu0 0.0
      %839 = vmatpush2.msra.mxu0 0.0
      %840 = vmatprep.subr.mxu0 0.0
      %841 = vmatpush2.msra.mxu0 0.0
      %842 = vmatprep.subr.mxu0 0.0
      %843 = vmatpush2.msra.mxu0 0.0
      %844 = vmatprep.subr.mxu0 0.0
      %845 = vmatpush2.msra.mxu0 0.0
      %846 = vmatprep.subr.mxu0 0.0
      %847 = vmatpush2.msra.mxu0 0.0
      %848 = vmatprep.mubr.f32.mxu0 0.0
      %849 = vmatmul.mubr.f32.gmra.mxu0 %v749
      %v850 = vpop.f32.mrf.mxu0
      %v851 = vadd.f32 %v690, %v850
      %v852 = vpop.f32.mrf.mxu0
      %853 = vmatprep.mubr.f32.mxu0 0.0
      %854 = vmatmul.mubr.f32.gmra.mxu0 %v752
      %v855 = vpop.f32.mrf.mxu0
      %v856 = vadd.f32 %v695, %v855
      %v857 = vpop.f32.mrf.mxu0
      %858 = vmatprep.mubr.f32.mxu0 0.0
      %859 = vmatmul.mubr.f32.gmra.mxu0 %v755
      %v860 = vpop.f32.mrf.mxu0
      %v861 = vadd.f32 %v700, %v860
      %v862 = vpop.f32.mrf.mxu0
      %863 = vmatprep.mubr.f32.mxu0 0.0
      %864 = vmatmul.mubr.f32.gmra.mxu0 %v758
      %v865 = vpop.f32.mrf.mxu0
      %v866 = vadd.f32 %v705, %v865
      %v867 = vpop.f32.mrf.mxu0
      %868 = vmatprep.mubr.f32.mxu0 0.0
      %869 = vmatmul.mubr.f32.gmra.mxu0 %v761
      %v870 = vpop.f32.mrf.mxu0
      %v871 = vadd.f32 %v710, %v870
      %v872 = vpop.f32.mrf.mxu0
      %873 = vmatprep.mubr.f32.mxu0 0.0
      %874 = vmatmul.mubr.f32.gmra.mxu0 %v764
      %v875 = vpop.f32.mrf.mxu0
      %v876 = vadd.f32 %v715, %v875
      %v877 = vpop.f32.mrf.mxu0
      %878 = vmatprep.mubr.f32.mxu0 0.0
      %879 = vmatmul.mubr.f32.gmra.mxu0 %v767
      %v880 = vpop.f32.mrf.mxu0
      %v881 = vadd.f32 %v720, %v880
      %v882 = vpop.f32.mrf.mxu0
      %883 = vmatprep.mubr.f32.mxu0 0.0
      %884 = vmatmul.mubr.f32.gmra.mxu0 %v770
      %v885 = vpop.f32.mrf.mxu0
      %v886 = vadd.f32 %v725, %v885
      %v887 = vpop.f32.mrf.mxu0
      %888 = vmatprep.mubr.f32.mxu0 0.0
      %889 = vmatmul.mubr.f32.gmra.mxu0 %v773
      %v890 = vpop.f32.mrf.mxu0
      %v891 = vadd.f32 %v730, %v890
      %v892 = vpop.f32.mrf.mxu0
      %893 = vmatprep.mubr.f32.mxu0 0.0
      %894 = vmatmul.mubr.f32.gmra.mxu0 %v776
      %v895 = vpop.f32.mrf.mxu0
      %v896 = vadd.f32 %v735, %v895
      %v897 = vpop.f32.mrf.mxu0
      %898 = vmatprep.mubr.f32.mxu0 0.0
      %899 = vmatmul.mubr.f32.gmra.mxu0 %v779
      %v900 = vpop.f32.mrf.mxu0
      %v901 = vadd.f32 %v740, %v900
      %v902 = vpop.f32.mrf.mxu0
      %903 = vmatprep.mubr.f32.mxu0 0.0
      %904 = vmatmul.mubr.f32.gmra.mxu0 %v782
      %v905 = vpop.f32.mrf.mxu0
      %v906 = vadd.f32 %v745, %v905
      %v907 = vpop.f32.mrf.mxu0
      %908 = vdwg.mxu0
      %v909 = vld [vmem:[%s6] sm:$0xff]
      %v910 = vld [vmem:[%s6 + $0x8] sm:$0xff]
      %v911 = vld [vmem:[%s6 + $0x10] sm:$0xff]
      %v912 = vld [vmem:[%s6 + $0x18] sm:$0xff]
      %v913 = vld [vmem:[%s6 + $0x20] sm:$0xff]
      %v914 = vld [vmem:[%s6 + $0x28] sm:$0xff]
      %v915 = vld [vmem:[%s6 + $0x30] sm:$0xff]
      %v916 = vld [vmem:[%s6 + $0x38] sm:$0xff]
      %v917 = vld [vmem:[%s6 + $0x40] sm:$0xff]
      %v918 = vld [vmem:[%s6 + $0x48] sm:$0xff]
      %v919 = vld [vmem:[%s6 + $0x50] sm:$0xff]
      %v920 = vld [vmem:[%s6 + $0x58] sm:$0xff]
      %v921 = vadd.f32 %v851, %v909
      %v922 = vadd.f32 %v856, %v910
      %v923 = vadd.f32 %v861, %v911
      %v924 = vadd.f32 %v866, %v912
      %v925 = vadd.f32 %v871, %v913
      %v926 = vadd.f32 %v876, %v914
      %v927 = vadd.f32 %v881, %v915
      %v928 = vadd.f32 %v886, %v916
      %v929 = vadd.f32 %v891, %v917
      %v930 = vadd.f32 %v896, %v918
      %v931 = vadd.f32 %v901, %v919
      %v932 = vadd.f32 %v906, %v920
      %v933 = vld [vmem:[%s7] sm:$0xff]
      %v934 = vld [vmem:[%s7 + $0x8] sm:$0xff]
      %v935 = vld [vmem:[%s7 + $0x10] sm:$0xff]
      %v936 = vld [vmem:[%s7 + $0x18] sm:$0xff]
      %v937 = vld [vmem:[%s7 + $0x20] sm:$0xff]
      %v938 = vld [vmem:[%s7 + $0x28] sm:$0xff]
      %v939 = vld [vmem:[%s7 + $0x30] sm:$0xff]
      %v940 = vld [vmem:[%s7 + $0x38] sm:$0xff]
      %v941 = vld [vmem:[%s8] sm:$0xff]
      %v942 = vld [vmem:[%s8 + $0x8] sm:$0xff]
      %v943 = vld [vmem:[%s8 + $0x10] sm:$0xff]
      %v944 = vld [vmem:[%s8 + $0x18] sm:$0xff]
      %v945 = vld [vmem:[%s8 + $0x20] sm:$0xff]
      %v946 = vld [vmem:[%s8 + $0x28] sm:$0xff]
      %v947 = vld [vmem:[%s8 + $0x30] sm:$0xff]
      %v948 = vld [vmem:[%s8 + $0x38] sm:$0xff]
      %vm949 = vcmask 785408
      %v951 = vsel %vm949, %v933, 0
      %v954 = vsel %vm949, %v934, 0
      %v957 = vsel %vm949, %v935, 0
      %v960 = vsel %vm949, %v936, 0
      %v963 = vsel %vm949, %v937, 0
      %v966 = vsel %vm949, %v938, 0
      %v969 = vsel %vm949, %v939, 0
      %v972 = vsel %vm949, %v940, 0
      %974 = vmatprep.subr.mxu0 0.0
      %975 = vmatpush1.msra.mxu0 0.0
      %976 = vmatprep.subr.mxu0 0.0
      %977 = vmatpush1.msra.mxu0 0.0
      %978 = vmatprep.subr.mxu0 0.0
      %979 = vmatpush1.msra.mxu0 0.0
      %980 = vmatprep.subr.mxu0 0.0
      %981 = vmatpush1.msra.mxu0 0.0
      %982 = vmatprep.subr.mxu0 0.0
      %983 = vmatpush1.msra.mxu0 %v932
      %984 = vmatprep.subr.mxu0 0.0
      %985 = vmatpush1.msra.mxu0 %v931
      %986 = vmatprep.subr.mxu0 0.0
      %987 = vmatpush1.msra.mxu0 %v930
      %988 = vmatprep.subr.mxu0 0.0
      %989 = vmatpush1.msra.mxu0 %v929
      %990 = vmatprep.subr.mxu0 0.0
      %991 = vmatpush1.msra.mxu0 %v928
      %992 = vmatprep.subr.mxu0 0.0
      %993 = vmatpush1.msra.mxu0 %v927
      %994 = vmatprep.subr.mxu0 0.0
      %995 = vmatpush1.msra.mxu0 %v926
      %996 = vmatprep.subr.mxu0 0.0
      %997 = vmatpush1.msra.mxu0 %v925
      %998 = vmatprep.subr.mxu0 0.0
      %999 = vmatpush1.msra.mxu0 %v924
      %1000 = vmatprep.subr.mxu0 0.0
      %1001 = vmatpush1.msra.mxu0 %v923
      %1002 = vmatprep.subr.mxu0 0.0
      %1003 = vmatpush1.msra.mxu0 %v922
      %1004 = vmatprep.subr.mxu0 0.0
      %1005 = vmatpush1.msra.mxu0 %v921
      %1006 = vmatprep.subr.mxu0 0.0
      %1007 = vmatpush2.msra.mxu0 0.0
      %1008 = vmatprep.subr.mxu0 0.0
      %1009 = vmatpush2.msra.mxu0 0.0
      %1010 = vmatprep.subr.mxu0 0.0
      %1011 = vmatpush2.msra.mxu0 0.0
      %1012 = vmatprep.subr.mxu0 0.0
      %1013 = vmatpush2.msra.mxu0 0.0
      %1014 = vmatprep.subr.mxu0 0.0
      %1015 = vmatpush2.msra.mxu0 0.0
      %1016 = vmatprep.subr.mxu0 0.0
      %1017 = vmatpush2.msra.mxu0 0.0
      %1018 = vmatprep.subr.mxu0 0.0
      %1019 = vmatpush2.msra.mxu0 0.0
      %1020 = vmatprep.subr.mxu0 0.0
      %1021 = vmatpush2.msra.mxu0 0.0
      %1022 = vmatprep.subr.mxu0 0.0
      %1023 = vmatpush2.msra.mxu0 0.0
      %1024 = vmatprep.subr.mxu0 0.0
      %1025 = vmatpush2.msra.mxu0 0.0
      %1026 = vmatprep.subr.mxu0 0.0
      %1027 = vmatpush2.msra.mxu0 0.0
      %1028 = vmatprep.subr.mxu0 0.0
      %1029 = vmatpush2.msra.mxu0 0.0
      %1030 = vmatprep.subr.mxu0 0.0
      %1031 = vmatpush2.msra.mxu0 0.0
      %1032 = vmatprep.subr.mxu0 0.0
      %1033 = vmatpush2.msra.mxu0 0.0
      %1034 = vmatprep.subr.mxu0 0.0
      %1035 = vmatpush2.msra.mxu0 0.0
      %1036 = vmatprep.subr.mxu0 0.0
      %1037 = vmatpush2.msra.mxu0 0.0
      %1038 = vmatprep.mubr.f32.mxu0 0.0
      %1039 = vmatmul.mubr.f32.gmra.mxu0 %v951
      %v1040 = vpop.f32.mrf.mxu0
      %v1041 = vadd.f32 %v941, %v1040
      %v1042 = vpop.f32.mrf.mxu0
      %1043 = vmatprep.mubr.f32.mxu0 0.0
      %1044 = vmatmul.mubr.f32.gmra.mxu0 %v954
      %v1045 = vpop.f32.mrf.mxu0
      %v1046 = vadd.f32 %v942, %v1045
      %v1047 = vpop.f32.mrf.mxu0
      %1048 = vmatprep.mubr.f32.mxu0 0.0
      %1049 = vmatmul.mubr.f32.gmra.mxu0 %v957
      %v1050 = vpop.f32.mrf.mxu0
      %v1051 = vadd.f32 %v943, %v1050
      %v1052 = vpop.f32.mrf.mxu0
      %1053 = vmatprep.mubr.f32.mxu0 0.0
      %1054 = vmatmul.mubr.f32.gmra.mxu0 %v960
      %v1055 = vpop.f32.mrf.mxu0
      %v1056 = vadd.f32 %v944, %v1055
      %v1057 = vpop.f32.mrf.mxu0
      %1058 = vmatprep.mubr.f32.mxu0 0.0
      %1059 = vmatmul.mubr.f32.gmra.mxu0 %v963
      %v1060 = vpop.f32.mrf.mxu0
      %v1061 = vadd.f32 %v945, %v1060
      %v1062 = vpop.f32.mrf.mxu0
      %1063 = vmatprep.mubr.f32.mxu0 0.0
      %1064 = vmatmul.mubr.f32.gmra.mxu0 %v966
      %v1065 = vpop.f32.mrf.mxu0
      %v1066 = vadd.f32 %v946, %v1065
      %v1067 = vpop.f32.mrf.mxu0
      %1068 = vmatprep.mubr.f32.mxu0 0.0
      %1069 = vmatmul.mubr.f32.gmra.mxu0 %v969
      %v1070 = vpop.f32.mrf.mxu0
      %v1071 = vadd.f32 %v947, %v1070
      %v1072 = vpop.f32.mrf.mxu0
      %1073 = vmatprep.mubr.f32.mxu0 0.0
      %1074 = vmatmul.mubr.f32.gmra.mxu0 %v972
      %v1075 = vpop.f32.mrf.mxu0
      %v1076 = vadd.f32 %v948, %v1075
      %v1077 = vpop.f32.mrf.mxu0
      %1078 = vdwg.mxu0
      %v1079 = vxor.u32 %v1041, 2147483648
      %v1080 = vxor.u32 %v1046, 2147483648
      %v1081 = vxor.u32 %v1051, 2147483648
      %v1082 = vxor.u32 %v1056, 2147483648
      %v1083 = vxor.u32 %v1061, 2147483648
      %v1084 = vxor.u32 %v1066, 2147483648
      %v1085 = vxor.u32 %v1071, 2147483648
      %v1086 = vxor.u32 %v1076, 2147483648
      %v1087 = vmul.f32 %v1079, 1.442695
      %v1088 = vpow.pop %v1087
      %v1089 = vmul.f32 %v1080, 1.442695
      %v1090 = vpow.pop %v1089
      %v1091 = vmul.f32 %v1081, 1.442695
      %v1092 = vpow.pop %v1091
      %v1093 = vmul.f32 %v1082, 1.442695
      %v1094 = vpow.pop %v1093
      %v1095 = vmul.f32 %v1083, 1.442695
      %v1096 = vpow.pop %v1095
      %v1097 = vmul.f32 %v1084, 1.442695
      %v1098 = vpow.pop %v1097
      %v1099 = vmul.f32 %v1085, 1.442695
      %v1100 = vpow.pop %v1099
      %v1101 = vmul.f32 %v1086, 1.442695
      %v1102 = vpow.pop %v1101
      %v1103 = vadd.f32 %v1088, 1.0
      %v1104 = vadd.f32 %v1090, 1.0
      %v1105 = vadd.f32 %v1092, 1.0
      %v1106 = vadd.f32 %v1094, 1.0
      %v1107 = vadd.f32 %v1096, 1.0
      %v1108 = vadd.f32 %v1098, 1.0
      %v1109 = vadd.f32 %v1100, 1.0
      %v1110 = vadd.f32 %v1102, 1.0
      %v1111 = vrcp.pop %v1103
      %v1112 = vmul.f32 1.0, %v1111
      %v1113 = vrcp.pop %v1104
      %v1114 = vmul.f32 1.0, %v1113
      %v1115 = vrcp.pop %v1105
      %v1116 = vmul.f32 1.0, %v1115
      %v1117 = vrcp.pop %v1106
      %v1118 = vmul.f32 1.0, %v1117
      %v1119 = vrcp.pop %v1107
      %v1120 = vmul.f32 1.0, %v1119
      %v1121 = vrcp.pop %v1108
      %v1122 = vmul.f32 1.0, %v1121
      %v1123 = vrcp.pop %v1109
      %v1124 = vmul.f32 1.0, %v1123
      %v1125 = vrcp.pop %v1110
      %v1126 = vmul.f32 1.0, %v1125
      %v1127 = vadd.f32 %v1112, 1.0
      %v1128 = vadd.f32 %v1114, 1.0
      %v1129 = vadd.f32 %v1116, 1.0
      %v1130 = vadd.f32 %v1118, 1.0
      %v1131 = vadd.f32 %v1120, 1.0
      %v1132 = vadd.f32 %v1122, 1.0
      %v1133 = vadd.f32 %v1124, 1.0
      %v1134 = vadd.f32 %v1126, 1.0
      %1136 = vset.pattern.permute.xlu0 0
      %1137 = vperm.xlu0 %1136, %v1127
      %v1138 = vpop.permute.xlu0 %1137
      %1141 = vset.pattern.permute.xlu0 0
      %1142 = vperm.xlu0 %1141, %v1128
      %v1143 = vpop.permute.xlu0 %1142
      %1146 = vset.pattern.permute.xlu0 0
      %1147 = vperm.xlu0 %1146, %v1129
      %v1148 = vpop.permute.xlu0 %1147
      %1151 = vset.pattern.permute.xlu0 0
      %1152 = vperm.xlu0 %1151, %v1130
      %v1153 = vpop.permute.xlu0 %1152
      %1156 = vset.pattern.permute.xlu0 0
      %1157 = vperm.xlu0 %1156, %v1131
      %v1158 = vpop.permute.xlu0 %1157
      %1161 = vset.pattern.permute.xlu0 0
      %1162 = vperm.xlu0 %1161, %v1132
      %v1163 = vpop.permute.xlu0 %1162
      %1166 = vset.pattern.permute.xlu0 0
      %1167 = vperm.xlu0 %1166, %v1133
      %v1168 = vpop.permute.xlu0 %1167
      %1171 = vset.pattern.permute.xlu0 0
      %1172 = vperm.xlu0 %1171, %v1134
      %v1173 = vpop.permute.xlu0 %1172
      %v1175 = vmul.f32 %v353, %v1138
      %v1176 = vmul.f32 %v354, %v1138
      %v1177 = vmul.f32 %v355, %v1143
      %v1178 = vmul.f32 %v356, %v1143
      %v1179 = vmul.f32 %v357, %v1148
      %v1180 = vmul.f32 %v358, %v1148
      %v1181 = vmul.f32 %v359, %v1153
      %v1182 = vmul.f32 %v360, %v1153
      %v1183 = vmul.f32 %v361, %v1158
      %v1184 = vmul.f32 %v362, %v1158
      %v1185 = vmul.f32 %v363, %v1163
      %v1186 = vmul.f32 %v364, %v1163
      %v1187 = vmul.f32 %v365, %v1168
      %v1188 = vmul.f32 %v366, %v1168
      %v1189 = vmul.f32 %v367, %v1173
      %v1190 = vmul.f32 %v368, %v1173
      %1191 = vst [vmem:[%s352] sm:$0xff] %v1175
      %1192 = vst [vmem:[%s352 + $0x8] sm:$0xff] %v1176
      %1193 = vst [vmem:[%s352 + $0x10] sm:$0xff] %v1177
      %1194 = vst [vmem:[%s352 + $0x18] sm:$0xff] %v1178
      %1195 = vst [vmem:[%s352 + $0x20] sm:$0xff] %v1179
      %1196 = vst [vmem:[%s352 + $0x28] sm:$0xff] %v1180
      %1197 = vst [vmem:[%s352 + $0x30] sm:$0xff] %v1181
      %1198 = vst [vmem:[%s352 + $0x38] sm:$0xff] %v1182
      %1199 = vst [vmem:[%s352 + $0x40] sm:$0xff] %v1183
      %1200 = vst [vmem:[%s352 + $0x48] sm:$0xff] %v1184
      %1201 = vst [vmem:[%s352 + $0x50] sm:$0xff] %v1185
      %1202 = vst [vmem:[%s352 + $0x58] sm:$0xff] %v1186
      %1203 = vst [vmem:[%s352 + $0x60] sm:$0xff] %v1187
      %1204 = vst [vmem:[%s352 + $0x68] sm:$0xff] %v1188
      %1205 = vst [vmem:[%s352 + $0x70] sm:$0xff] %v1189
      %1206 = vst [vmem:[%s352 + $0x78] sm:$0xff] %v1190
      %p1207 = scmp.lt.s32.totalorder %s20, 1
      %s1208 = scalar_select %p1207, %s20, 1
      %s1209 = smul.addr %s1208, 16
      %s1210 = smul.addr %s1209, 8
      %s1211 = scalar_lea.vmem %s9, %s1210
      // Predicated region
      $region57: #{dgfmb_forward.1} parent=55 // pred_check
        %p1212 = pneg %p237
      $region58: #{dgfmb_forward.1} parent=55 // pred_check_branch
        %1214 = sbr.rel (%p1212) target = $region60
      $region59: #{dgfmb_forward.1} parent=55 // pred_region
        _
      $region60: #{dgfmb_forward.1} parent=55 // pred_fallthru
        _
    $region56: #{dgfmb_forward.1} parent=5 // pred_fallthru
      _
    %p1215 = scmp.le.s32.totalorder 2, %s15
    // Predicated region
    $region61: #{dgfmb_forward.1} parent=5 // pred_check
      %p1216 = pneg %p1215
    $region62: #{dgfmb_forward.1} parent=5 // pred_check_branch
      %1218 = sbr.rel (%p1216) target = $region64
    $region63: #{dgfmb_forward.1} parent=5 // pred_region
      %s1219 = ssub.s32 %s15, 2
      // Predicated region
      $region65: #{dgfmb_forward.1} parent=63 // pred_check
        %p1220 = pneg %p243
      $region66: #{dgfmb_forward.1} parent=63 // pred_check_branch
        %1222 = sbr.rel (%p1220) target = $region68
      $region67: #{dgfmb_forward.1} parent=63 // pred_region
        %p1223 = scmp.lt.s32.totalorder %s21, 1
        %s1224 = scalar_select %p1223, %s21, 1
        %s1225 = smul.addr %s1224, 16
        %s1226 = smul.addr %s1225, 8
        %s1227 = scalar_lea.vmem %s9, %s1226
      $region68: #{dgfmb_forward.1} parent=63 // pred_fallthru
        _
    $region64: #{dgfmb_forward.1} parent=5 // pred_fallthru
      _
  $region6: #{dgfmb_forward.1} parent=0 // loop_footer
    %s19 = sadd.s32 1, %s15
  $region7: #{dgfmb_forward.1} parent=0 // loop_footer_branch
    %14 = sbr.rel target = $region3
  $region8: #{dgfmb_forward.1} parent=0 // loop_exit
    _

</llo_original>
